<compile_context>
chip_gen: v5e
topology: v5e:2x2
jax: 0.10.0
libtpu: 0.0.40
codegen_flags: <defaults>
</compile_context>

<pallas_src>
import functools

import jax
import jax.numpy as jnp
from jax.experimental import pallas as pl
from jax.experimental.pallas import tpu as pltpu


def make_embed_kernel(depth):
    def embed_kernel(p_ref, x_ref, o_ref):
        # p_ref: (depth, E, E) resident in VMEM; x_ref/o_ref: (E, TN).
        mxu_dt = p_ref.dtype

        def mm(i, rhs):
            # Cast only the dot operand; ReLU / accumulation stay in f32.
            return jnp.dot(p_ref[i], rhs.astype(mxu_dt),
                           preferred_element_type=jnp.float32)

        # Mirrors the PyTorch forward exactly (incl. its depth==1 behavior,
        # where P_0 is applied twice with a ReLU in between).
        cur = jnp.maximum(mm(0, x_ref[...]), 0.0)
        for i in range(1, depth - 1):
            cur = jnp.maximum(mm(i, cur), 0.0)
        cur = mm(depth - 1, cur)
        o_ref[...] = cur.astype(o_ref.dtype)

    return embed_kernel


def _round_up(v, m):
    return -(-v // m) * m


def _per_lane_vmem_bytes(E, in_itemsize, out_itemsize):
    # Double-buffered in + out tiles (Pallas pipeline) plus ~3x f32
    # intermediates (live `cur` chain / cast copies) per lane column.
    return E * (2 * in_itemsize + 2 * out_itemsize + 3 * 4)


def _pick_tile_n(N, B, E, depth, in_itemsize, out_itemsize,
                 vmem_budget_bytes=20 * 1024 * 1024):
    """Lane tile for the (E, tile_n) activation blocks.

    N must already be a multiple of 128.  Objectives (in order):
      (a) fit the VMEM budget (tiles + intermediates + resident P),
      (b) give >= 4 total grid steps so the auto-pipeline overlaps DMA with
          compute and v7x's two TensorCores both get work,
      (c) keep per-step DMA bytes above a floor so the ~0.35 us/step overhead
          stays small.
    """
    p_bytes = depth * E * E * 4
    per_lane = _per_lane_vmem_bytes(E, in_itemsize, out_itemsize)
    max_lanes = max(128, ((vmem_budget_bytes - p_bytes) // per_lane) // 128 * 128)

    # ~1 MiB of (in + out) DMA per step as the primary floor.
    floor_lanes = _round_up(
        max(1, -(-(1 << 20) // (E * (in_itemsize + out_itemsize)))), 128)

    candidates = [t for t in range(128, N + 1, 128) if N % t == 0]
    fitting = [t for t in candidates if t <= max_lanes] or [candidates[0]]
    best = fitting[-1]  # largest tile that fits VMEM (fallback)

    # Tiered relaxation: prefer >=4 steps above the 1 MiB floor, then >=4
    # steps above a ~256 KiB floor, then >=2 steps.
    for min_steps, min_lanes in ((4, floor_lanes),
                                 (4, max(128, floor_lanes // 4)),
                                 (2, max(128, floor_lanes // 4))):
        good = [t for t in fitting if B * (N // t) >= min_steps and t >= min_lanes]
        if good:
            return max(good)
    return best


@functools.partial(jax.jit, static_argnames=("mxu_dtype",))
def embed_layer_pallas(p_stack, x, *, mxu_dtype=jnp.float32):
    """p_stack: (depth, E, E), x: (B, E, N) -> (B, E, N)."""
    depth, E, E_ = p_stack.shape
    B, E2, N = x.shape
    assert E == E_ == E2

    # Lane-dense layout: pad N up to a multiple of 128.  Zero columns stay
    # zero through the matmul/ReLU chain and are sliced off at the end.
    N_pad = max(128, _round_up(N, 128))
    if N_pad != N:
        x = jnp.pad(x, ((0, 0), (0, 0), (0, N_pad - N)))

    # P is tiny (depth*E*E); casting it in the wrapper is negligible traffic.
    p_in = p_stack.astype(mxu_dtype)
    # NOTE: x is intentionally NOT cast here (extra HBM pass on a mem-bound
    # kernel); any operand cast happens per-layer inside the kernel.

    in_itemsize = jnp.dtype(x.dtype).itemsize
    out_itemsize = jnp.dtype(x.dtype).itemsize
    tile_n = _pick_tile_n(N_pad, B, E, depth, in_itemsize, out_itemsize)
    grid = (B, N_pad // tile_n)

    # Matching scoped-VMEM limit (with headroom), safe on all generations
    # (well under v7x's 64 MiB physical VMEM).
    p_bytes = depth * E * E * jnp.dtype(mxu_dtype).itemsize
    vmem_need = p_bytes + tile_n * _per_lane_vmem_bytes(E, in_itemsize, out_itemsize)
    vmem_limit = int(min(max(vmem_need + vmem_need // 2 + (2 << 20), 16 << 20),
                         40 << 20))

    kernel = make_embed_kernel(depth)
    flops = 2 * depth * E * E * B * N_pad
    bytes_accessed = (p_in.size * p_in.dtype.itemsize
                      + B * E * N_pad * in_itemsize
                      + B * E * N_pad * out_itemsize)

    out = pl.pallas_call(
        kernel,
        out_shape=jax.ShapeDtypeStruct((B, E, N_pad), x.dtype),
        grid_spec=pltpu.PrefetchScalarGridSpec(
            num_scalar_prefetch=0,
            grid=grid,
            in_specs=[
                # Full P stack, constant index_map -> stays resident in VMEM.
                pl.BlockSpec((depth, E, E), lambda b, j: (0, 0, 0)),
                # Native (B, E, N) layout: batch squeezed, lane-tiled columns.
                pl.BlockSpec((pl.Squeezed(), E, tile_n), lambda b, j: (b, 0, j)),
            ],
            out_specs=pl.BlockSpec((pl.Squeezed(), E, tile_n),
                                   lambda b, j: (b, 0, j)),
        ),
        compiler_params=pltpu.CompilerParams(
            dimension_semantics=("parallel", "parallel"),
            vmem_limit_bytes=vmem_limit,
        ),
        cost_estimate=pl.CostEstimate(
            flops=flops, transcendentals=0, bytes_accessed=bytes_accessed),
    )(p_in, x)

    if N_pad != N:
        out = out[:, :, :N]
    return out


def embed_layer_ref(p_stack, x):
    """Pure-JAX reference mirroring the PyTorch forward exactly."""
    depth = p_stack.shape[0]
    cur = jnp.maximum(jnp.einsum('ik,akj->aij', p_stack[0], x), 0.0)
    for i in range(1, depth - 1):
        cur = jnp.maximum(jnp.einsum('ik,akj->aij', p_stack[i], cur), 0.0)
    return jnp.einsum('ik,akj->aij', p_stack[depth - 1], cur)


if __name__ == "__main__":
    embedding_depth = 3
    embedding_size = 32
    batch = 2
    nodes = 128

    key = jax.random.PRNGKey(0)
    kp, kx, kx2 = jax.random.split(key, 3)
    # Deterministic stand-in for torch.randn parameter init.
    p_stack = jax.random.normal(
        kp, (embedding_depth, embedding_size, embedding_size), dtype=jnp.float32)
    x = jax.random.normal(kx, (batch, embedding_size, nodes), dtype=jnp.float32)

    out = jax.block_until_ready(embed_layer_pallas(p_stack, x))
    ref = embed_layer_ref(p_stack, x)
    assert out.shape == (batch, embedding_size, nodes)
    assert jnp.allclose(out, ref, atol=1e-3, rtol=1e-4), "mismatch vs reference"

    # Also exercise the pad-to-128 path (nodes not a multiple of 128).
    nodes2 = 96
    x2 = jax.random.normal(kx2, (batch, embedding_size, nodes2), dtype=jnp.float32)
    out2 = jax.block_until_ready(embed_layer_pallas(p_stack, x2))
    ref2 = embed_layer_ref(p_stack, x2)
    assert out2.shape == (batch, embedding_size, nodes2)
    assert jnp.allclose(out2, ref2, atol=1e-3, rtol=1e-4), "mismatch vs reference (padded)"

    # Optional on any generation: embed_layer_pallas(p_stack, x, mxu_dtype=jnp.bfloat16)
    # for bf16 MXU operands (in-kernel cast only); validate with looser tolerance,
    # which loosens with embedding_depth since the activation is re-quantized per layer.

    print("KERNEL_OK")
</pallas_src>

<mosaic_0001>
module attributes {stable_mosaic.version = 11 : i64} {
  func.func @embed_kernel(%arg0: i32, %arg1: i32, %arg2: memref<3x32x32xf32, #tpu.memory_space<vmem>>, %arg3: memref<1x32x128xf32, #tpu.memory_space<vmem>>, %arg4: memref<1x32x128xf32, #tpu.memory_space<vmem>>) attributes {dimension_semantics = [#tpu.dimension_semantics<parallel>, #tpu.dimension_semantics<parallel>], iteration_bounds = array<i64: 2, 1>, scalar_prefetch = 0 : i64, scratch_operands = 0 : i64, tpu.core_type = #tpu.core_type<tc>, window_params = [{pipeline_mode = #tpu.pipeline_mode<synchronous>, transform_indices = @transform_0, window_bounds = array<i64: 3, 32, 32>}, {transform_indices = @transform_1, window_bounds = array<i64: 1, 32, 128>}, {transform_indices = @transform_2, window_bounds = array<i64: 1, 32, 128>}]} {
    %c0 = arith.constant 0 : index
    %c0_0 = arith.constant 0 : index
    %c0_1 = arith.constant 0 : index
    %0 = vector.load %arg3[%c0, %c0_0, %c0_1] : memref<1x32x128xf32, #tpu.memory_space<vmem>>, vector<1x32x128xf32>
    %1 = vector.shape_cast %0 : vector<1x32x128xf32> to vector<32x128xf32>
    %c0_2 = arith.constant 0 : index
    %c0_3 = arith.constant 0 : index
    %c0_4 = arith.constant 0 : index
    %2 = vector.load %arg2[%c0_2, %c0_3, %c0_4] : memref<3x32x32xf32, #tpu.memory_space<vmem>>, vector<1x32x32xf32>
    %3 = vector.shape_cast %2 : vector<1x32x32xf32> to vector<32x32xf32>
    %cst = arith.constant dense<0.000000e+00> : vector<32x128xf32>
    %4 = tpu.matmul %3, %1, %cst {dimension_numbers = #tpu.dot_dimension_numbers<[1], [0], [0], [1], [0, 0, 1, 1], [], []>} : vector<32x32xf32>, vector<32x128xf32>, vector<32x128xf32> -> vector<32x128xf32>
    %cst_5 = arith.constant 0.000000e+00 : f32
    %5 = vector.broadcast %cst_5 : f32 to vector<32x128xf32>
    %6 = arith.maximumf %4, %5 : vector<32x128xf32>
    %c1 = arith.constant 1 : index
    %c0_6 = arith.constant 0 : index
    %c0_7 = arith.constant 0 : index
    %7 = vector.load %arg2[%c1, %c0_6, %c0_7] : memref<3x32x32xf32, #tpu.memory_space<vmem>>, vector<1x32x32xf32>
    %8 = vector.shape_cast %7 : vector<1x32x32xf32> to vector<32x32xf32>
    %cst_8 = arith.constant dense<0.000000e+00> : vector<32x128xf32>
    %9 = tpu.matmul %8, %6, %cst_8 {dimension_numbers = #tpu.dot_dimension_numbers<[1], [0], [0], [1], [0, 0, 1, 1], [], []>} : vector<32x32xf32>, vector<32x128xf32>, vector<32x128xf32> -> vector<32x128xf32>
    %cst_9 = arith.constant 0.000000e+00 : f32
    %10 = vector.broadcast %cst_9 : f32 to vector<32x128xf32>
    %11 = arith.maximumf %9, %10 : vector<32x128xf32>
    %c2 = arith.constant 2 : index
    %c0_10 = arith.constant 0 : index
    %c0_11 = arith.constant 0 : index
    %12 = vector.load %arg2[%c2, %c0_10, %c0_11] : memref<3x32x32xf32, #tpu.memory_space<vmem>>, vector<1x32x32xf32>
    %13 = vector.shape_cast %12 : vector<1x32x32xf32> to vector<32x32xf32>
    %cst_12 = arith.constant dense<0.000000e+00> : vector<32x128xf32>
    %14 = tpu.matmul %13, %11, %cst_12 {dimension_numbers = #tpu.dot_dimension_numbers<[1], [0], [0], [1], [0, 0, 1, 1], [], []>} : vector<32x32xf32>, vector<32x128xf32>, vector<32x128xf32> -> vector<32x128xf32>
    %c0_13 = arith.constant 0 : index
    %c0_14 = arith.constant 0 : index
    %c0_15 = arith.constant 0 : index
    %15 = vector.load %arg4[%c0_13, %c0_14, %c0_15] : memref<1x32x128xf32, #tpu.memory_space<vmem>>, vector<1x32x128xf32>
    %16 = vector.shape_cast %15 : vector<1x32x128xf32> to vector<32x128xf32>
    %17 = vector.shape_cast %14 : vector<32x128xf32> to vector<1x32x128xf32>
    tpu.vector_store %arg4[%c0_13, %c0_14, %c0_15], %17 {strides = array<i32>} : memref<1x32x128xf32, #tpu.memory_space<vmem>>, vector<1x32x128xf32>,
    return
  }
  func.func @transform_0(%arg0: i32, %arg1: i32) -> (i32, i32, i32) {
    %c0_i32 = arith.constant 0 : i32
    %c0_i32_0 = arith.constant 0 : i32
    %c0_i32_1 = arith.constant 0 : i32
    %c0_i32_2 = arith.constant 0 : i32
    return %c0_i32, %c0_i32_0, %c0_i32_1 : i32, i32, i32
  }
  func.func @transform_1(%arg0: i32, %arg1: i32) -> (i32, i32, i32) {
    %c0_i32 = arith.constant 0 : i32
    %c0_i32_0 = arith.constant 0 : i32
    return %arg0, %c0_i32, %arg1 : i32, i32, i32
  }
  func.func @transform_2(%arg0: i32, %arg1: i32) -> (i32, i32, i32) {
    %c0_i32 = arith.constant 0 : i32
    %c0_i32_0 = arith.constant 0 : i32
    return %arg0, %c0_i32, %arg1 : i32, i32, i32
  }
}

</mosaic_0001>

<llo_original>
// kernel: embed_layer_pallas.1
$region0: #{embed_layer_pallas.1}
  #allocation0 [shape = 'u32[]', space=smem, size = 0x4, offset = 0x4, fixed_abs, tag = 'smem constant byte address 0x4 - core index']
  #allocation1 [shape = 'u32[72,128]{1,0:T(1,128)}', space=vmem, size = 0x9000, scoped, tag = 'internal scratch']
  %s0 = inlined_call_operand.hbm [shape: f32[3,32,32], index: 0, kind: input, shape index: {}]
  %s1 = inlined_call_operand.hbm [shape: f32[2,32,128], index: 1, kind: input, shape index: {}]
  %s2 = inlined_call_operand.hbm [shape: f32[2,32,128], index: 2, kind: output, shape index: {}]
  %s3 = sld [smem:[#allocation0]]
  $region49: #{embed_layer_pallas.1} parent=0
    _
  %s5 = ssub.s32 1, %s3
  %s6 = scalar_select 0, %s5, %s3
  $region1: #{embed_layer_pallas.1} parent=0
    #allocation2 [shape = 'u8[49152]{0}', space=vmem, size = 0xc000, scoped, tag = 'input window, operand 0, single buffered']
    #allocation3 [shape = 's32[2]{0}', space=sflag, size = 0x8, scoped, tag = 'scoped memory for embed_layer_pallas.1']
    #allocation4 [shape = 's32[2]{0}', space=sflag, size = 0x8, scoped, tag = 'scoped memory for embed_layer_pallas.1']
    #allocation5 [shape = 'u8[32768]{0}', space=vmem, size = 0x8000, scoped, tag = 'input window, operand 1']
    #allocation6 [shape = 's32[2]{0}', space=sflag, size = 0x8, scoped, tag = 'scoped memory for embed_layer_pallas.1']
    #allocation7 [shape = 'u8[32768]{0}', space=vmem, size = 0x8000, scoped, tag = 'output window, operand 0']
    %7 = vsyncpa [#allocation3], 0
    %8 = vsyncpa [#allocation6], 0
    %s9 = scalar_lea.sflag [#allocation6], 1
    %10 = vsyncpa %s9, 0
    %11 = vsyncpa [#allocation4], 0
    %s12 = scalar_lea.sflag [#allocation4], 1
    %13 = vsyncpa %s12, 0
    loop: start=0, step=1, limit=4
    $region2: #{embed_layer_pallas.1} parent=1 // loop_pre_header
      _
    $region3: #{embed_layer_pallas.1} parent=1 // loop_header
      %s15 = sphi 0, %s19
      %p16 = scmp.ge.s32.totalorder %s15, 4
      %s22 = sphi 0, %s34
      %s23 = sphi 0, %s30
      %s24 = sphi 0, %s22
      %s25 = sphi 0, %s23
      %s26 = sphi 0, %s24
      %s27 = sphi 0, %s25
      %s35 = sphi 0, %s35
      %s37 = sphi 0, %s35
      %s38 = sphi 0, %s37
      %s52 = sphi 0, %s38
      %s60 = sphi 0, %s62
      %s63 = sphi 0, %s60
      %s64 = sphi 0, %s63
      %s80 = sphi 0, %s64
      %s88 = sphi 0, %s90
      %s91 = sphi 0, %s88
      %s92 = sphi 0, %s91
      %s108 = sphi 0, %s92
    $region4: #{embed_layer_pallas.1} parent=1 // loop_header_branch
      %18 = sbr.rel (%p16) target = $region8
    $region5: #{embed_layer_pallas.1} parent=1 // loop_body
      %s20 = ssub.s32 %s15, 1
      %s21 = ssub.s32 %s15, 2
      %s28 = sadd.s32 1, %s23
      %p29 = scmp.ge.s32.totalorder %s28, 1
      %s30 = scalar_select %p29, 0, %s28
      %s31 = sadd.s32 1, %s22
      %s32 = scalar_select %p29, %s31, %s22
      %p33 = scmp.ge.s32.totalorder %s32, 2
      %s34 = scalar_select %p33, 0, %s32
      %s36 = sadd.s32 %s35, 1
      %p39 = scmp.eq.s32.totalorder %s15, 1
      %p40 = scmp.ne.s32.totalorder %s35, %s37
      %p41 = scmp.eq.s32.totalorder %s15, 0
      %p42 = por %p40, %p41
      %p43 = scmp.ne.s32.totalorder %s35, %s37
      %p44 = scmp.eq.s32.totalorder %s20, 1
      %p45 = por %p43, %p44
      %p46 = scmp.ne.s32.totalorder %s37, %s38
      %p47 = scmp.eq.s32.totalorder %s20, 0
      %p48 = por %p46, %p47
      %p49 = scmp.ne.s32.totalorder %s37, %s38
      %p50 = scmp.eq.s32.totalorder %s21, 1
      %p51 = por %p49, %p50
      %p53 = scmp.ne.s32.totalorder %s38, %s52
      %p54 = scmp.eq.s32.totalorder %s21, 0
      %p55 = por %p53, %p54
      %s56 = ssub.s32 %s22, %s34
      %s57 = ssub.s32 %s23, %s30
      %s58 = sor.u32 %s56, %s57
      %p59 = scmp.eq.s32.totalorder %s58, 0
      %s61 = sadd.s32 %s60, 1
      %s62 = scalar_select %p59, %s60, %s61
      %p65 = pneg %p59
      %p66 = scmp.eq.s32.totalorder %s15, 1
      %p67 = por %p65, %p66
      %p68 = scmp.ne.s32.totalorder %s60, %s63
      %p69 = scmp.eq.s32.totalorder %s15, 0
      %p70 = por %p68, %p69
      %p71 = scmp.ne.s32.totalorder %s60, %s63
      %p72 = scmp.eq.s32.totalorder %s20, 1
      %p73 = por %p71, %p72
      %p74 = scmp.ne.s32.totalorder %s63, %s64
      %p75 = scmp.eq.s32.totalorder %s20, 0
      %p76 = por %p74, %p75
      %p77 = scmp.ne.s32.totalorder %s63, %s64
      %p78 = scmp.eq.s32.totalorder %s21, 1
      %p79 = por %p77, %p78
      %p81 = scmp.ne.s32.totalorder %s64, %s80
      %p82 = scmp.eq.s32.totalorder %s21, 0
      %p83 = por %p81, %p82
      %s84 = ssub.s32 %s22, %s34
      %s85 = ssub.s32 %s23, %s30
      %s86 = sor.u32 %s84, %s85
      %p87 = scmp.eq.s32.totalorder %s86, 0
      %s89 = sadd.s32 %s88, 1
      %s90 = scalar_select %p87, %s88, %s89
      %p93 = pneg %p87
      %p94 = scmp.eq.s32.totalorder %s15, 1
      %p95 = por %p93, %p94
      %p96 = scmp.ne.s32.totalorder %s88, %s91
      %p97 = scmp.eq.s32.totalorder %s15, 0
      %p98 = por %p96, %p97
      %p99 = scmp.ne.s32.totalorder %s88, %s91
      %p100 = scmp.eq.s32.totalorder %s20, 1
      %p101 = por %p99, %p100
      %p102 = scmp.ne.s32.totalorder %s91, %s92
      %p103 = scmp.eq.s32.totalorder %s20, 0
      %p104 = por %p102, %p103
      %p105 = scmp.ne.s32.totalorder %s91, %s92
      %p106 = scmp.eq.s32.totalorder %s21, 1
      %p107 = por %p105, %p106
      %p109 = scmp.ne.s32.totalorder %s92, %s108
      %p110 = scmp.eq.s32.totalorder %s21, 0
      %p111 = por %p109, %p110
      %p112 = scmp.le.s32.totalorder 1, %s15
      %p113 = scmp.lt.s32.totalorder %s15, 3
      %p114 = pnand %p112, %p113
      %p115 = pneg %p114
      // Predicated region
      $region9: #{embed_layer_pallas.1} parent=5 // pred_check
        _
      $region10: #{embed_layer_pallas.1} parent=5 // pred_check_branch
        %117 = sbr.rel (%p114) target = $region12
      $region11: #{embed_layer_pallas.1} parent=5 // pred_region
        %s118 = ssub.s32 %s15, 1
        // Predicated region
        $region13: #{embed_layer_pallas.1} parent=11 // pred_check
          %p119 = pneg %p48
        $region14: #{embed_layer_pallas.1} parent=11 // pred_check_branch
          %121 = sbr.rel (%p119) target = $region16
        $region15: #{embed_layer_pallas.1} parent=11 // pred_region
          %123 = vsyncadd [#allocation3], 0
          %s124 = sshll.u32 %s0, 4
          %s125 = int_to_ptr.hbm [resolvable:$true] %s124
          %s126 = sshll.u32 [#allocation2], 4
          %s127 = int_to_ptr.vmem [resolvable:$true] %s126
          %132 = dma.hbm_to_vmem [thread:$0]  %s125, 1536, %s127, [#allocation3], 128, 128, 8
        $region16: #{embed_layer_pallas.1} parent=11 // pred_fallthru
          _
      $region12: #{embed_layer_pallas.1} parent=5 // pred_fallthru
        _
      %p133 = scmp.lt.s32.totalorder %s15, 2
      // Predicated region
      $region17: #{embed_layer_pallas.1} parent=5 // pred_check
        %p134 = pneg %p133
      $region18: #{embed_layer_pallas.1} parent=5 // pred_check_branch
        %136 = sbr.rel (%p134) target = $region20
      $region19: #{embed_layer_pallas.1} parent=5 // pred_region
        // Predicated region
        $region21: #{embed_layer_pallas.1} parent=19 // pred_check
          %p137 = pneg %p70
        $region22: #{embed_layer_pallas.1} parent=19 // pred_check_branch
          %139 = sbr.rel (%p137) target = $region24
        $region23: #{embed_layer_pallas.1} parent=19 // pred_region
          %s140 = sand.u32 %s60, 1
          %s141 = scalar_lea.sflag [#allocation6], %s140
          %s142 = sand.u32 %s60, 1
          %s143 = smul.addr %s142, 32
          %s144 = scalar_lea.vmem [#allocation5], %s143
          %146 = vsyncadd %s141, 0
          %s147 = smul.addr %s22, 4
          %s148 = sadd.s32 %s23, %s147
          %s149 = smul.addr %s148, 8
          %s150 = scalar_lea.hbm %s1, %s149
          %s151 = sshll.u32 %s150, 4
          %s152 = int_to_ptr.hbm [resolvable:$true] %s151
          %s153 = sshll.u32 %s144, 4
          %s154 = int_to_ptr.vmem [resolvable:$true] %s153
          %159 = dma.hbm_to_vmem [thread:$0]  %s152, 512, %s154, %s141, 128, 128, 8
        $region24: #{embed_layer_pallas.1} parent=19 // pred_fallthru
          _
      $region20: #{embed_layer_pallas.1} parent=5 // pred_fallthru
        _
      %p160 = scmp.le.s32.totalorder 1, %s15
      %p161 = scmp.lt.s32.totalorder %s15, 3
      %p162 = pnand %p160, %p161
      %p163 = pneg %p162
      // Predicated region
      $region25: #{embed_layer_pallas.1} parent=5 // pred_check
        _
      $region26: #{embed_layer_pallas.1} parent=5 // pred_check_branch
        %165 = sbr.rel (%p162) target = $region28
      $region27: #{embed_layer_pallas.1} parent=5 // pred_region
        %s166 = ssub.s32 %s15, 1
        // Predicated region
        $region29: #{embed_layer_pallas.1} parent=27 // pred_check
          %p167 = pneg %p48
        $region30: #{embed_layer_pallas.1} parent=27 // pred_check_branch
          %169 = sbr.rel (%p167) target = $region32
        $region31: #{embed_layer_pallas.1} parent=27 // pred_region
          %171 = dma.done [#allocation3], 1536
        $region32: #{embed_layer_pallas.1} parent=27 // pred_fallthru
          _
        %s172 = sand.u32 %s63, 1
        %s173 = scalar_lea.sflag [#allocation6], %s172
        %s174 = sand.u32 %s63, 1
        %s175 = smul.addr %s174, 32
        %s176 = scalar_lea.vmem [#allocation5], %s175
        // Predicated region
        $region33: #{embed_layer_pallas.1} parent=27 // pred_check
          %p177 = pneg %p76
        $region34: #{embed_layer_pallas.1} parent=27 // pred_check_branch
          %179 = sbr.rel (%p177) target = $region36
        $region35: #{embed_layer_pallas.1} parent=27 // pred_region
          %181 = dma.done %s173, 512
        $region36: #{embed_layer_pallas.1} parent=27 // pred_fallthru
          _
        %p182 = pneg %p48
        %p183 = pneg %p45
        %s184 = sand.u32 %s63, 1
        %s185 = scalar_lea.sflag [#allocation6], %s184
        %s186 = sand.u32 %s63, 1
        %s187 = smul.addr %s186, 32
        %s188 = scalar_lea.vmem [#allocation5], %s187
        %p189 = pneg %p76
        %p190 = pneg %p73
        %p191 = pneg %p104
        %p192 = pneg %p101
        %s193 = sand.u32 %s91, 1
        %s194 = scalar_lea.sflag [#allocation4], %s193
        %s195 = sand.u32 %s91, 1
        %s196 = smul.addr %s195, 32
        %s197 = scalar_lea.vmem [#allocation7], %s196
        %v198 = vld [vmem:[%s176] sm:$0xff]
        %v199 = vld [vmem:[%s176 + $0x8] sm:$0xff]
        %v200 = vld [vmem:[%s176 + $0x10] sm:$0xff]
        %v201 = vld [vmem:[%s176 + $0x18] sm:$0xff]
        %v202 = vld [vmem:[#allocation2] sm:$0xff]
        %v203 = vld [vmem:[#allocation2 + $0x8] sm:$0xff]
        %v204 = vld [vmem:[#allocation2 + $0x10] sm:$0xff]
        %v205 = vld [vmem:[#allocation2 + $0x18] sm:$0xff]
        %vm206 = vcmask 261120
        %v208 = vsel %vm206, %v202, 0
        %v211 = vsel %vm206, %v203, 0
        %v214 = vsel %vm206, %v204, 0
        %v217 = vsel %vm206, %v205, 0
        %219 = vmatpush.msra.mxu0 0.0
        %220 = vmatpush.msra.mxu0 0.0
        %221 = vmatpush.msra.mxu0 0.0
        %222 = vmatpush.msra.mxu0 0.0
        %223 = vmatpush.msra.mxu0 0.0
        %224 = vmatpush.msra.mxu0 0.0
        %225 = vmatpush.msra.mxu0 0.0
        %226 = vmatpush.msra.mxu0 0.0
        %227 = vmatpush.msra.mxu0 0.0
        %228 = vmatpush.msra.mxu0 0.0
        %229 = vmatpush.msra.mxu0 0.0
        %230 = vmatpush.msra.mxu0 0.0
        %231 = vmatpush.msra.mxu0 %v201
        %232 = vmatpush.msra.mxu0 %v200
        %233 = vmatpush.msra.mxu0 %v199
        %234 = vmatpush.msra.mxu0 %v198
        %235 = vmatmul.f32.gmra.mxu0 %v208
        %v236 = vpop.f32.mrf.mxu0
        %v237 = vadd.f32 0.0, %v236
        %238 = vmatmul.f32.gmra.mxu0 %v211
        %v239 = vpop.f32.mrf.mxu0
        %v240 = vadd.f32 0.0, %v239
        %241 = vmatmul.f32.gmra.mxu0 %v214
        %v242 = vpop.f32.mrf.mxu0
        %v243 = vadd.f32 0.0, %v242
        %244 = vmatmul.f32.gmra.mxu0 %v217
        %v245 = vpop.f32.mrf.mxu0
        %v246 = vadd.f32 0.0, %v245
        %247 = vdwg.mxu0
        %v248 = vmax.f32 %v237, 0.0
        %v249 = vmax.f32 %v240, 0.0
        %v250 = vmax.f32 %v243, 0.0
        %v251 = vmax.f32 %v246, 0.0
        %s252 = scalar_lea.vmem [#allocation2], 32
        %v253 = vld [vmem:[%s252] sm:$0xff]
        %v254 = vld [vmem:[%s252 + $0x8] sm:$0xff]
        %v255 = vld [vmem:[%s252 + $0x10] sm:$0xff]
        %v256 = vld [vmem:[%s252 + $0x18] sm:$0xff]
        %v258 = vsel %vm206, %v253, 0
        %v261 = vsel %vm206, %v254, 0
        %v264 = vsel %vm206, %v255, 0
        %v267 = vsel %vm206, %v256, 0
        %269 = vmatpush.msra.mxu0 0.0
        %270 = vmatpush.msra.mxu0 0.0
        %271 = vmatpush.msra.mxu0 0.0
        %272 = vmatpush.msra.mxu0 0.0
        %273 = vmatpush.msra.mxu0 0.0
        %274 = vmatpush.msra.mxu0 0.0
        %275 = vmatpush.msra.mxu0 0.0
        %276 = vmatpush.msra.mxu0 0.0
        %277 = vmatpush.msra.mxu0 0.0
        %278 = vmatpush.msra.mxu0 0.0
        %279 = vmatpush.msra.mxu0 0.0
        %280 = vmatpush.msra.mxu0 0.0
        %281 = vmatpush.msra.mxu0 %v251
        %282 = vmatpush.msra.mxu0 %v250
        %283 = vmatpush.msra.mxu0 %v249
        %284 = vmatpush.msra.mxu0 %v248
        %285 = vmatmul.f32.gmra.mxu0 %v258
        %v286 = vpop.f32.mrf.mxu0
        %v287 = vadd.f32 0.0, %v286
        %288 = vmatmul.f32.gmra.mxu0 %v261
        %v289 = vpop.f32.mrf.mxu0
        %v290 = vadd.f32 0.0, %v289
        %291 = vmatmul.f32.gmra.mxu0 %v264
        %v292 = vpop.f32.mrf.mxu0
        %v293 = vadd.f32 0.0, %v292
        %294 = vmatmul.f32.gmra.mxu0 %v267
        %v295 = vpop.f32.mrf.mxu0
        %v296 = vadd.f32 0.0, %v295
        %297 = vdwg.mxu0
        %v298 = vmax.f32 %v287, 0.0
        %v299 = vmax.f32 %v290, 0.0
        %v300 = vmax.f32 %v293, 0.0
        %v301 = vmax.f32 %v296, 0.0
        %s302 = scalar_lea.vmem [#allocation2], 64
        %v303 = vld [vmem:[%s302] sm:$0xff]
        %v304 = vld [vmem:[%s302 + $0x8] sm:$0xff]
        %v305 = vld [vmem:[%s302 + $0x10] sm:$0xff]
        %v306 = vld [vmem:[%s302 + $0x18] sm:$0xff]
        %v308 = vsel %vm206, %v303, 0
        %v311 = vsel %vm206, %v304, 0
        %v314 = vsel %vm206, %v305, 0
        %v317 = vsel %vm206, %v306, 0
        %319 = vmatpush.msra.mxu0 0.0
        %320 = vmatpush.msra.mxu0 0.0
        %321 = vmatpush.msra.mxu0 0.0
        %322 = vmatpush.msra.mxu0 0.0
        %323 = vmatpush.msra.mxu0 0.0
        %324 = vmatpush.msra.mxu0 0.0
        %325 = vmatpush.msra.mxu0 0.0
        %326 = vmatpush.msra.mxu0 0.0
        %327 = vmatpush.msra.mxu0 0.0
        %328 = vmatpush.msra.mxu0 0.0
        %329 = vmatpush.msra.mxu0 0.0
        %330 = vmatpush.msra.mxu0 0.0
        %331 = vmatpush.msra.mxu0 %v301
        %332 = vmatpush.msra.mxu0 %v300
        %333 = vmatpush.msra.mxu0 %v299
        %334 = vmatpush.msra.mxu0 %v298
        %335 = vmatmul.f32.gmra.mxu0 %v308
        %v336 = vpop.f32.mrf.mxu0
        %v337 = vadd.f32 0.0, %v336
        %338 = vmatmul.f32.gmra.mxu0 %v311
        %v339 = vpop.f32.mrf.mxu0
        %v340 = vadd.f32 0.0, %v339
        %341 = vmatmul.f32.gmra.mxu0 %v314
        %v342 = vpop.f32.mrf.mxu0
        %v343 = vadd.f32 0.0, %v342
        %344 = vmatmul.f32.gmra.mxu0 %v317
        %v345 = vpop.f32.mrf.mxu0
        %v346 = vadd.f32 0.0, %v345
        %347 = vdwg.mxu0
        %348 = vst [vmem:[%s197] sm:$0xff] %v337
        %349 = vst [vmem:[%s197 + $0x8] sm:$0xff] %v340
        %350 = vst [vmem:[%s197 + $0x10] sm:$0xff] %v343
        %351 = vst [vmem:[%s197 + $0x18] sm:$0xff] %v346
        %s352 = sand.u32 %s91, 1
        %s353 = scalar_lea.sflag [#allocation4], %s352
        %s354 = sand.u32 %s91, 1
        %s355 = smul.addr %s354, 32
        %s356 = scalar_lea.vmem [#allocation7], %s355
        // Predicated region
        $region37: #{embed_layer_pallas.1} parent=27 // pred_check
          %p357 = pneg %p101
        $region38: #{embed_layer_pallas.1} parent=27 // pred_check_branch
          %359 = sbr.rel (%p357) target = $region40
        $region39: #{embed_layer_pallas.1} parent=27 // pred_region
          %361 = vsyncadd %s353, 0
          %s362 = smul.addr %s24, 4
          %s363 = sadd.s32 %s25, %s362
          %s364 = smul.addr %s363, 8
          %s365 = scalar_lea.hbm %s2, %s364
          %s366 = sshll.u32 %s356, 4
          %s367 = int_to_ptr.vmem [resolvable:$true] %s366
          %s368 = sshll.u32 %s365, 4
          %s369 = int_to_ptr.hbm [resolvable:$true] %s368
          %374 = dma.vmem_to_hbm [thread:$0]  %s367, 512, %s369, %s353, 128, 128, 8
        $region40: #{embed_layer_pallas.1} parent=27 // pred_fallthru
          _
      $region28: #{embed_layer_pallas.1} parent=5 // pred_fallthru
        _
      %p375 = scmp.le.s32.totalorder 2, %s15
      // Predicated region
      $region41: #{embed_layer_pallas.1} parent=5 // pred_check
        %p376 = pneg %p375
      $region42: #{embed_layer_pallas.1} parent=5 // pred_check_branch
        %378 = sbr.rel (%p376) target = $region44
      $region43: #{embed_layer_pallas.1} parent=5 // pred_region
        %s379 = ssub.s32 %s15, 2
        // Predicated region
        $region45: #{embed_layer_pallas.1} parent=43 // pred_check
          %p380 = pneg %p107
        $region46: #{embed_layer_pallas.1} parent=43 // pred_check_branch
          %382 = sbr.rel (%p380) target = $region48
        $region47: #{embed_layer_pallas.1} parent=43 // pred_region
          %s383 = sand.u32 %s92, 1
          %s384 = scalar_lea.sflag [#allocation4], %s383
          %s385 = sand.u32 %s92, 1
          %s386 = smul.addr %s385, 32
          %s387 = scalar_lea.vmem [#allocation7], %s386
          %389 = dma.done %s384, 512
        $region48: #{embed_layer_pallas.1} parent=43 // pred_fallthru
          _
      $region44: #{embed_layer_pallas.1} parent=5 // pred_fallthru
        _
    $region6: #{embed_layer_pallas.1} parent=1 // loop_footer
      %s19 = sadd.s32 1, %s15
    $region7: #{embed_layer_pallas.1} parent=1 // loop_footer_branch
      %14 = sbr.rel target = $region3
    $region8: #{embed_layer_pallas.1} parent=1 // loop_exit
      _
    %390 = vsyncpa [#allocation3], 1
    %s391 = scalar_lea.sflag [#allocation3], 1
    %392 = vsyncpa %s391, 1
    %393 = vsyncpa [#allocation6], 1
    %s394 = scalar_lea.sflag [#allocation6], 1
    %395 = vsyncpa %s394, 1
    %396 = vsyncpa [#allocation4], 1
    %s397 = scalar_lea.sflag [#allocation4], 1
    %398 = vsyncpa %s397, 1

</llo_original>
